<compile_context>
chip_gen: v5e
topology: v5e:2x2
jax: 0.10.0
libtpu: 0.0.40
codegen_flags: <defaults>
</compile_context>

<pallas_src>
import jax
import jax.numpy as jnp
from jax.experimental import pallas as pl
from jax.experimental.pallas import tpu as pltpu


def _glu_kernel(out_ref, gate_ref, o_ref):
    # Pure elementwise, memory-bound.  exp() lands on the EUP slot; the VPU has
    # ample slack, so exact sigmoid keeps PyTorch semantics at HBM roofline.
    o_ref[...] = out_ref[0] * jax.nn.sigmoid(gate_ref[0])


def _largest_tile(total, granule, max_tile):
    """Largest divisor of `total` that is a multiple of `granule` and <= max_tile.
    Returns None if no such divisor exists."""
    best = None
    t = granule
    while t <= total and t <= max_tile:
        if total % t == 0:
            best = t
        t += granule
    return best


def glu_nchw(x, dim=1, *, target_block_bytes=2 * 1024 * 1024):
    """GLU over dim=1 of an NCHW tensor: out, gate = chunk(x, 2, 1); out * sigmoid(gate)."""
    assert dim == 1, "this kernel is specialized for dim=1 (NCHW channel split)"
    B, C, H, W = x.shape
    assert C % 2 == 0, "channel dim must be even for GLU"
    Ch = C // 2
    HW = H * W

    # Lane-dense, split-friendly view: (B, half, Ch, H*W).  Free reshape for a
    # contiguous NCHW array; half 0 = "out" channels, half 1 = "gate" channels.
    x4 = x.reshape(B, 2, Ch, HW)

    itemsize = jnp.dtype(x.dtype).itemsize
    # Sublane granule: 8 rows for 32-bit, 16 for 16-bit, 32 for 8-bit dtypes.
    ch_granule = max(8, 32 // itemsize)

    # ---- tile selection (decoupled from problem shape) ----------------------
    # hw_tile: multiple of 128 (unmasked, lane-dense vst).  If HW is not
    # 128-divisible, the full extent is the only legal block choice.
    if HW % 128 == 0:
        max_hw = max(128, target_block_bytes // (ch_granule * itemsize))
        hw_tile = _largest_tile(HW, 128, max_hw) or HW
    else:
        hw_tile = HW

    # ch_tile: multiple of the sublane granule (or the full channel half),
    # sized so one block stays around target_block_bytes.  6 block copies are
    # live at once (2 inputs + 1 output, double buffered).
    if Ch % ch_granule == 0:
        max_ch = max(ch_granule, target_block_bytes // (hw_tile * itemsize))
        ch_tile = _largest_tile(Ch, ch_granule, max_ch) or ch_granule
    else:
        ch_tile = Ch

    n_cblk = Ch // ch_tile
    n_hwblk = HW // hw_tile
    grid = (B, n_cblk, n_hwblk)

    in_block = (1, 1, ch_tile, hw_tile)
    out_block = (1, ch_tile, hw_tile)

    out_spec = pl.BlockSpec(in_block, lambda b, c, h: (b, 0, c, h))   # first half
    gate_spec = pl.BlockSpec(in_block, lambda b, c, h: (b, 1, c, h))  # second half
    o_spec = pl.BlockSpec(out_block, lambda b, c, h: (b, c, h))

    block_bytes = ch_tile * hw_tile * itemsize
    # 6 live block copies + headroom; never below the v6e/v7x scoped default,
    # which also raises v5e's 16 MiB default (all within physical VMEM).
    vmem_limit = int(max(32 * 1024 * 1024, 8 * block_bytes))

    f = pl.pallas_call(
        _glu_kernel,
        out_shape=jax.ShapeDtypeStruct((B, Ch, HW), x.dtype),
        grid=grid,
        in_specs=[out_spec, gate_spec],
        out_specs=o_spec,
        compiler_params=pltpu.CompilerParams(
            dimension_semantics=("parallel", "parallel", "parallel"),
            vmem_limit_bytes=vmem_limit,
        ),
    )
    # Same array passed twice; the two BlockSpecs read disjoint channel halves,
    # so HBM traffic is not duplicated.
    y = f(x4, x4)
    return y.reshape(B, Ch, H, W)


if __name__ == "__main__":
    key = jax.random.PRNGKey(0)
    B, C, H, W = 2, 4, 16, 16
    x = jax.random.normal(key, (B, C, H, W), dtype=jnp.float32)

    y = glu_nchw(x, dim=1)
    y = jax.block_until_ready(y)

    # Reference (pure JAX) check of PyTorch semantics: x.chunk(2, dim=1)
    out_ref, gate_ref = jnp.split(x, 2, axis=1)
    y_ref = out_ref * jax.nn.sigmoid(gate_ref)

    assert y.shape == (B, C // 2, H, W)
    assert jnp.allclose(y, y_ref, atol=1e-6, rtol=1e-6)

    print("KERNEL_OK")
</pallas_src>

<mosaic_0001>
module attributes {stable_mosaic.version = 11 : i64} {
  func.func @_glu_kernel(%arg0: i32, %arg1: i32, %arg2: i32, %arg3: memref<1x1x2x256xf32, #tpu.memory_space<vmem>>, %arg4: memref<1x1x2x256xf32, #tpu.memory_space<vmem>>, %arg5: memref<1x2x256xf32, #tpu.memory_space<vmem>>) attributes {dimension_semantics = [#tpu.dimension_semantics<parallel>, #tpu.dimension_semantics<parallel>, #tpu.dimension_semantics<parallel>], iteration_bounds = array<i64: 2, 1, 1>, scalar_prefetch = 0 : i64, scratch_operands = 0 : i64, tpu.core_type = #tpu.core_type<tc>, window_params = [{transform_indices = @transform_0, window_bounds = array<i64: 1, 1, 2, 256>}, {transform_indices = @transform_1, window_bounds = array<i64: 1, 1, 2, 256>}, {transform_indices = @transform_2, window_bounds = array<i64: 1, 2, 256>}]} {
    %c0 = arith.constant 0 : index
    %c0_0 = arith.constant 0 : index
    %c0_1 = arith.constant 0 : index
    %c0_2 = arith.constant 0 : index
    %0 = vector.load %arg3[%c0, %c0_0, %c0_1, %c0_2] : memref<1x1x2x256xf32, #tpu.memory_space<vmem>>, vector<1x1x2x256xf32>
    %1 = vector.shape_cast %0 : vector<1x1x2x256xf32> to vector<1x2x256xf32>
    %c0_3 = arith.constant 0 : index
    %c0_4 = arith.constant 0 : index
    %c0_5 = arith.constant 0 : index
    %c0_6 = arith.constant 0 : index
    %2 = vector.load %arg4[%c0_3, %c0_4, %c0_5, %c0_6] : memref<1x1x2x256xf32, #tpu.memory_space<vmem>>, vector<1x1x2x256xf32>
    %3 = vector.shape_cast %2 : vector<1x1x2x256xf32> to vector<1x2x256xf32>
    %4 = arith.negf %3 : vector<1x2x256xf32>
    %5 = math.exp %4 : vector<1x2x256xf32>
    %cst = arith.constant 1.000000e+00 : f32
    %6 = vector.broadcast %cst : f32 to vector<1x2x256xf32>
    %7 = arith.addf %6, %5 : vector<1x2x256xf32>
    %8 = arith.divf %6, %7 : vector<1x2x256xf32>
    %9 = arith.mulf %1, %8 : vector<1x2x256xf32>
    %c0_7 = arith.constant 0 : index
    %c0_8 = arith.constant 0 : index
    %c0_9 = arith.constant 0 : index
    %10 = vector.load %arg5[%c0_7, %c0_8, %c0_9] : memref<1x2x256xf32, #tpu.memory_space<vmem>>, vector<1x2x256xf32>
    tpu.vector_store %arg5[%c0_7, %c0_8, %c0_9], %9 {strides = array<i32>} : memref<1x2x256xf32, #tpu.memory_space<vmem>>, vector<1x2x256xf32>,
    return
  }
  func.func @transform_0(%arg0: i32, %arg1: i32, %arg2: i32) -> (i32, i32, i32, i32) {
    %c0_i32 = arith.constant 0 : i32
    %c0_i32_0 = arith.constant 0 : i32
    return %arg0, %c0_i32, %arg1, %arg2 : i32, i32, i32, i32
  }
  func.func @transform_1(%arg0: i32, %arg1: i32, %arg2: i32) -> (i32, i32, i32, i32) {
    %c1_i32 = arith.constant 1 : i32
    %c0_i32 = arith.constant 0 : i32
    return %arg0, %c1_i32, %arg1, %arg2 : i32, i32, i32, i32
  }
  func.func @transform_2(%arg0: i32, %arg1: i32, %arg2: i32) -> (i32, i32, i32) {
    %c0_i32 = arith.constant 0 : i32
    return %arg0, %arg1, %arg2 : i32, i32, i32
  }
}

</mosaic_0001>

<llo_original>
// kernel: tpu_custom_call.1
$region0: #{tpu_custom_call.1}
  #allocation0 [shape = 'u32[]', space=smem, size = 0x4, offset = 0x4, fixed_abs, tag = 'smem constant byte address 0x4 - core index']
  #allocation1 [shape = 'u32[72,128]{1,0:T(1,128)}', space=vmem, size = 0x9000, scoped, tag = 'internal scratch']
  %s0 = inlined_call_operand.hbm [shape: f32[2,2,2,256], index: 0, kind: input, shape index: {}]
  %s1 = inlined_call_operand.hbm [shape: f32[2,2,2,256], index: 1, kind: input, shape index: {}]
  %s2 = inlined_call_operand.hbm [shape: f32[2,2,256], index: 2, kind: output, shape index: {}]
  %s3 = sld [smem:[#allocation0]]
  $region49: #{tpu_custom_call.1} parent=0
    _
  %s5 = ssub.s32 1, %s3
  %s6 = scalar_select 0, %s5, %s3
  $region1: #{tpu_custom_call.1} parent=0
    #allocation2 [shape = 'u8[4096]{0}', space=vmem, size = 0x1000, scoped, tag = 'input window, operand 0']
    #allocation3 [shape = 's32[2]{0}', space=sflag, size = 0x8, scoped, tag = 'scoped memory for tpu_custom_call.1']
    #allocation4 [shape = 's32[2]{0}', space=sflag, size = 0x8, scoped, tag = 'scoped memory for tpu_custom_call.1']
    #allocation5 [shape = 'u8[4096]{0}', space=vmem, size = 0x1000, scoped, tag = 'input window, operand 1']
    #allocation6 [shape = 's32[2]{0}', space=sflag, size = 0x8, scoped, tag = 'scoped memory for tpu_custom_call.1']
    #allocation7 [shape = 'u8[4096]{0}', space=vmem, size = 0x1000, scoped, tag = 'output window, operand 0']
    %7 = vsyncpa [#allocation3], 0
    %s8 = scalar_lea.sflag [#allocation3], 1
    %9 = vsyncpa %s8, 0
    %10 = vsyncpa [#allocation6], 0
    %s11 = scalar_lea.sflag [#allocation6], 1
    %12 = vsyncpa %s11, 0
    %13 = vsyncpa [#allocation4], 0
    %s14 = scalar_lea.sflag [#allocation4], 1
    %15 = vsyncpa %s14, 0
    loop: start=0, step=1, limit=4
    $region2: #{tpu_custom_call.1} parent=1 // loop_pre_header
      _
    $region3: #{tpu_custom_call.1} parent=1 // loop_header
      %s17 = sphi 0, %s21
      %p18 = scmp.ge.s32.totalorder %s17, 4
      %s24 = sphi 0, %s43
      %s25 = sphi 0, %s39
      %s26 = sphi 0, %s35
      %s27 = sphi 0, %s24
      %s28 = sphi 0, %s25
      %s29 = sphi 0, %s26
      %s30 = sphi 0, %s27
      %s31 = sphi 0, %s28
      %s32 = sphi 0, %s29
      %s50 = sphi 0, %s52
      %s53 = sphi 0, %s50
      %s54 = sphi 0, %s53
      %s70 = sphi 0, %s54
      %s80 = sphi 0, %s82
      %s83 = sphi 0, %s80
      %s84 = sphi 0, %s83
      %s100 = sphi 0, %s84
      %s110 = sphi 0, %s112
      %s113 = sphi 0, %s110
      %s114 = sphi 0, %s113
      %s130 = sphi 0, %s114
    $region4: #{tpu_custom_call.1} parent=1 // loop_header_branch
      %20 = sbr.rel (%p18) target = $region8
    $region5: #{tpu_custom_call.1} parent=1 // loop_body
      %s22 = ssub.s32 %s17, 1
      %s23 = ssub.s32 %s17, 2
      %s33 = sadd.s32 1, %s26
      %p34 = scmp.ge.s32.totalorder %s33, 1
      %s35 = scalar_select %p34, 0, %s33
      %s36 = sadd.s32 1, %s25
      %s37 = scalar_select %p34, %s36, %s25
      %p38 = scmp.ge.s32.totalorder %s37, 1
      %s39 = scalar_select %p38, 0, %s37
      %s40 = sadd.s32 1, %s24
      %s41 = scalar_select %p38, %s40, %s24
      %p42 = scmp.ge.s32.totalorder %s41, 2
      %s43 = scalar_select %p42, 0, %s41
      %s44 = ssub.s32 %s24, %s43
      %s45 = ssub.s32 %s25, %s39
      %s46 = sor.u32 %s44, %s45
      %s47 = ssub.s32 %s26, %s35
      %s48 = sor.u32 %s46, %s47
      %p49 = scmp.eq.s32.totalorder %s48, 0
      %s51 = sadd.s32 %s50, 1
      %s52 = scalar_select %p49, %s50, %s51
      %p55 = pneg %p49
      %p56 = scmp.eq.s32.totalorder %s17, 1
      %p57 = por %p55, %p56
      %p58 = scmp.ne.s32.totalorder %s50, %s53
      %p59 = scmp.eq.s32.totalorder %s17, 0
      %p60 = por %p58, %p59
      %p61 = scmp.ne.s32.totalorder %s50, %s53
      %p62 = scmp.eq.s32.totalorder %s22, 1
      %p63 = por %p61, %p62
      %p64 = scmp.ne.s32.totalorder %s53, %s54
      %p65 = scmp.eq.s32.totalorder %s22, 0
      %p66 = por %p64, %p65
      %p67 = scmp.ne.s32.totalorder %s53, %s54
      %p68 = scmp.eq.s32.totalorder %s23, 1
      %p69 = por %p67, %p68
      %p71 = scmp.ne.s32.totalorder %s54, %s70
      %p72 = scmp.eq.s32.totalorder %s23, 0
      %p73 = por %p71, %p72
      %s74 = ssub.s32 %s24, %s43
      %s75 = ssub.s32 %s25, %s39
      %s76 = sor.u32 %s74, %s75
      %s77 = ssub.s32 %s26, %s35
      %s78 = sor.u32 %s76, %s77
      %p79 = scmp.eq.s32.totalorder %s78, 0
      %s81 = sadd.s32 %s80, 1
      %s82 = scalar_select %p79, %s80, %s81
      %p85 = pneg %p79
      %p86 = scmp.eq.s32.totalorder %s17, 1
      %p87 = por %p85, %p86
      %p88 = scmp.ne.s32.totalorder %s80, %s83
      %p89 = scmp.eq.s32.totalorder %s17, 0
      %p90 = por %p88, %p89
      %p91 = scmp.ne.s32.totalorder %s80, %s83
      %p92 = scmp.eq.s32.totalorder %s22, 1
      %p93 = por %p91, %p92
      %p94 = scmp.ne.s32.totalorder %s83, %s84
      %p95 = scmp.eq.s32.totalorder %s22, 0
      %p96 = por %p94, %p95
      %p97 = scmp.ne.s32.totalorder %s83, %s84
      %p98 = scmp.eq.s32.totalorder %s23, 1
      %p99 = por %p97, %p98
      %p101 = scmp.ne.s32.totalorder %s84, %s100
      %p102 = scmp.eq.s32.totalorder %s23, 0
      %p103 = por %p101, %p102
      %s104 = ssub.s32 %s24, %s43
      %s105 = ssub.s32 %s25, %s39
      %s106 = sor.u32 %s104, %s105
      %s107 = ssub.s32 %s26, %s35
      %s108 = sor.u32 %s106, %s107
      %p109 = scmp.eq.s32.totalorder %s108, 0
      %s111 = sadd.s32 %s110, 1
      %s112 = scalar_select %p109, %s110, %s111
      %p115 = pneg %p109
      %p116 = scmp.eq.s32.totalorder %s17, 1
      %p117 = por %p115, %p116
      %p118 = scmp.ne.s32.totalorder %s110, %s113
      %p119 = scmp.eq.s32.totalorder %s17, 0
      %p120 = por %p118, %p119
      %p121 = scmp.ne.s32.totalorder %s110, %s113
      %p122 = scmp.eq.s32.totalorder %s22, 1
      %p123 = por %p121, %p122
      %p124 = scmp.ne.s32.totalorder %s113, %s114
      %p125 = scmp.eq.s32.totalorder %s22, 0
      %p126 = por %p124, %p125
      %p127 = scmp.ne.s32.totalorder %s113, %s114
      %p128 = scmp.eq.s32.totalorder %s23, 1
      %p129 = por %p127, %p128
      %p131 = scmp.ne.s32.totalorder %s114, %s130
      %p132 = scmp.eq.s32.totalorder %s23, 0
      %p133 = por %p131, %p132
      %p134 = scmp.le.s32.totalorder 1, %s17
      %p135 = scmp.lt.s32.totalorder %s17, 3
      %p136 = pnand %p134, %p135
      %p137 = pneg %p136
      // Predicated region
      $region9: #{tpu_custom_call.1} parent=5 // pred_check
        _
      $region10: #{tpu_custom_call.1} parent=5 // pred_check_branch
        %139 = sbr.rel (%p136) target = $region12
      $region11: #{tpu_custom_call.1} parent=5 // pred_region
        %s140 = ssub.s32 %s17, 1
      $region12: #{tpu_custom_call.1} parent=5 // pred_fallthru
        _
      %p141 = scmp.lt.s32.totalorder %s17, 2
      // Predicated region
      $region13: #{tpu_custom_call.1} parent=5 // pred_check
        %p142 = pneg %p141
      $region14: #{tpu_custom_call.1} parent=5 // pred_check_branch
        %144 = sbr.rel (%p142) target = $region16
      $region15: #{tpu_custom_call.1} parent=5 // pred_region
        // Predicated region
        $region17: #{tpu_custom_call.1} parent=15 // pred_check
          %p145 = pneg %p60
        $region18: #{tpu_custom_call.1} parent=15 // pred_check_branch
          %147 = sbr.rel (%p145) target = $region20
        $region19: #{tpu_custom_call.1} parent=15 // pred_region
          %s148 = sand.u32 %s50, 1
          %s149 = scalar_lea.sflag [#allocation3], %s148
          %s150 = sand.u32 %s50, 1
          %s151 = smul.addr %s150, 4
          %s152 = scalar_lea.vmem [#allocation2], %s151
          %s153 = smul.u32 2, %s26
          %155 = vsyncadd %s149, 0
          %s156 = smul.addr %s25, 2
          %s157 = sadd.s32 %s153, %s156
          %s158 = smul.addr %s24, 4
          %s159 = sadd.s32 %s157, %s158
          %s160 = smul.addr %s159, 2
          %s161 = scalar_lea.hbm %s0, %s160
          %s163 = sshll.u32 %s161, 4
          %s164 = int_to_ptr.hbm [resolvable:$true] %s163
          %s165 = sshll.u32 %s152, 4
          %s166 = int_to_ptr.vmem [resolvable:$true] %s165
          %168 = dma.hbm_to_vmem [thread:$0]  %s164, 64, %s166, %s149
        $region20: #{tpu_custom_call.1} parent=15 // pred_fallthru
          _
        // Predicated region
        $region21: #{tpu_custom_call.1} parent=15 // pred_check
          %p169 = pneg %p90
        $region22: #{tpu_custom_call.1} parent=15 // pred_check_branch
          %171 = sbr.rel (%p169) target = $region24
        $region23: #{tpu_custom_call.1} parent=15 // pred_region
          %s172 = sand.u32 %s80, 1
          %s173 = scalar_lea.sflag [#allocation6], %s172
          %s174 = sand.u32 %s80, 1
          %s175 = smul.addr %s174, 4
          %s176 = scalar_lea.vmem [#allocation5], %s175
          %s177 = smul.u32 2, %s26
          %179 = vsyncadd %s173, 0
          %s180 = smul.addr %s25, 2
          %s181 = sadd.s32 %s177, %s180
          %s182 = sadd.s32 %s181, 2
          %s183 = smul.addr %s24, 4
          %s184 = sadd.s32 %s182, %s183
          %s185 = smul.addr %s184, 2
          %s186 = scalar_lea.hbm %s1, %s185
          %s188 = sshll.u32 %s186, 4
          %s189 = int_to_ptr.hbm [resolvable:$true] %s188
          %s190 = sshll.u32 %s176, 4
          %s191 = int_to_ptr.vmem [resolvable:$true] %s190
          %193 = dma.hbm_to_vmem [thread:$0]  %s189, 64, %s191, %s173
        $region24: #{tpu_custom_call.1} parent=15 // pred_fallthru
          _
      $region16: #{tpu_custom_call.1} parent=5 // pred_fallthru
        _
      %p194 = scmp.le.s32.totalorder 1, %s17
      %p195 = scmp.lt.s32.totalorder %s17, 3
      %p196 = pnand %p194, %p195
      %p197 = pneg %p196
      // Predicated region
      $region25: #{tpu_custom_call.1} parent=5 // pred_check
        _
      $region26: #{tpu_custom_call.1} parent=5 // pred_check_branch
        %199 = sbr.rel (%p196) target = $region28
      $region27: #{tpu_custom_call.1} parent=5 // pred_region
        %s200 = ssub.s32 %s17, 1
        %s201 = sand.u32 %s53, 1
        %s202 = scalar_lea.sflag [#allocation3], %s201
        %s203 = sand.u32 %s53, 1
        %s204 = smul.addr %s203, 4
        %s205 = scalar_lea.vmem [#allocation2], %s204
        // Predicated region
        $region29: #{tpu_custom_call.1} parent=27 // pred_check
          %p206 = pneg %p66
        $region30: #{tpu_custom_call.1} parent=27 // pred_check_branch
          %208 = sbr.rel (%p206) target = $region32
        $region31: #{tpu_custom_call.1} parent=27 // pred_region
          %210 = dma.done %s202, 64
        $region32: #{tpu_custom_call.1} parent=27 // pred_fallthru
          _
        %s211 = sand.u32 %s83, 1
        %s212 = scalar_lea.sflag [#allocation6], %s211
        %s213 = sand.u32 %s83, 1
        %s214 = smul.addr %s213, 4
        %s215 = scalar_lea.vmem [#allocation5], %s214
        // Predicated region
        $region33: #{tpu_custom_call.1} parent=27 // pred_check
          %p216 = pneg %p96
        $region34: #{tpu_custom_call.1} parent=27 // pred_check_branch
          %218 = sbr.rel (%p216) target = $region36
        $region35: #{tpu_custom_call.1} parent=27 // pred_region
          %220 = dma.done %s212, 64
        $region36: #{tpu_custom_call.1} parent=27 // pred_fallthru
          _
        %s221 = sand.u32 %s53, 1
        %s222 = scalar_lea.sflag [#allocation3], %s221
        %s223 = sand.u32 %s53, 1
        %s224 = smul.addr %s223, 4
        %s225 = scalar_lea.vmem [#allocation2], %s224
        %p226 = pneg %p66
        %p227 = pneg %p63
        %s228 = sand.u32 %s83, 1
        %s229 = scalar_lea.sflag [#allocation6], %s228
        %s230 = sand.u32 %s83, 1
        %s231 = smul.addr %s230, 4
        %s232 = scalar_lea.vmem [#allocation5], %s231
        %p233 = pneg %p96
        %p234 = pneg %p93
        %p235 = pneg %p126
        %p236 = pneg %p123
        %s237 = sand.u32 %s113, 1
        %s238 = scalar_lea.sflag [#allocation4], %s237
        %s239 = sand.u32 %s113, 1
        %s240 = smul.addr %s239, 4
        %s241 = scalar_lea.vmem [#allocation7], %s240
        %s242 = smul.u32 2, %s29
        %s243 = smul.u32 2, %s29
        %s244 = smul.u32 2, %s29
        %v245 = vld [vmem:[%s205] sm:$0xf]
        %v246 = vld [vmem:[%s215] sm:$0xf]
        %v247 = vxor.u32 %v246, 2147483648
        %v248 = vmul.f32 %v247, 1.442695
        %v249 = vpow.pop %v248
        %v250 = vadd.f32 %v249, 1.0
        %v251 = vrcp.pop %v250
        %v252 = vmul.f32 %v250, %v251
        %v253 = vsub.f32 1.0, %v252
        %v254 = vmul.f32 %v251, %v253
        %v255 = vadd.f32 %v251, %v254
        %vm256 = vweird.f32 %v250
        %vm257 = vweird.f32 %v251
        %vm258 = vmor %vm256, %vm257
        %v259 = vsel %vm258, %v251, %v255
        %v260 = vand.u32 2147483647, %v250
        %vm261 = vcmp.eq.f32.partialorder %v260, 8.507059e+37
        %v262 = vand.u32 %v250, 2147483648
        %v263 = vor.u32 1.1754944e-38, %v262
        %v264 = vsel %vm261, %v263, %v259
        %v265 = vmul.f32 1.0, %v264
        %v266 = vmul.f32 %v245, %v265
        %267 = vst [vmem:[%s241] sm:$0xf] %v266
        %s268 = sand.u32 %s113, 1
        %s269 = scalar_lea.sflag [#allocation4], %s268
        %s270 = sand.u32 %s113, 1
        %s271 = smul.addr %s270, 4
        %s272 = scalar_lea.vmem [#allocation7], %s271
        // Predicated region
        $region37: #{tpu_custom_call.1} parent=27 // pred_check
          %p273 = pneg %p123
        $region38: #{tpu_custom_call.1} parent=27 // pred_check_branch
          %275 = sbr.rel (%p273) target = $region40
        $region39: #{tpu_custom_call.1} parent=27 // pred_region
          %s276 = smul.u32 2, %s29
          %278 = vsyncadd %s269, 0
          %s279 = smul.addr %s28, 2
          %s280 = sadd.s32 %s276, %s279
          %s281 = smul.addr %s27, 2
          %s282 = sadd.s32 %s280, %s281
          %s283 = smul.addr %s282, 2
          %s284 = scalar_lea.hbm %s2, %s283
          %s286 = sshll.u32 %s272, 4
          %s287 = int_to_ptr.vmem [resolvable:$true] %s286
          %s288 = sshll.u32 %s284, 4
          %s289 = int_to_ptr.hbm [resolvable:$true] %s288
          %291 = dma.vmem_to_hbm [thread:$0]  %s287, 64, %s289, %s269
        $region40: #{tpu_custom_call.1} parent=27 // pred_fallthru
          _
      $region28: #{tpu_custom_call.1} parent=5 // pred_fallthru
        _
      %p292 = scmp.le.s32.totalorder 2, %s17
      // Predicated region
      $region41: #{tpu_custom_call.1} parent=5 // pred_check
        %p293 = pneg %p292
      $region42: #{tpu_custom_call.1} parent=5 // pred_check_branch
        %295 = sbr.rel (%p293) target = $region44
      $region43: #{tpu_custom_call.1} parent=5 // pred_region
        %s296 = ssub.s32 %s17, 2
        // Predicated region
        $region45: #{tpu_custom_call.1} parent=43 // pred_check
          %p297 = pneg %p129
        $region46: #{tpu_custom_call.1} parent=43 // pred_check_branch
          %299 = sbr.rel (%p297) target = $region48
        $region47: #{tpu_custom_call.1} parent=43 // pred_region
          %s300 = sand.u32 %s114, 1
          %s301 = scalar_lea.sflag [#allocation4], %s300
          %s302 = sand.u32 %s114, 1
          %s303 = smul.addr %s302, 4
          %s304 = scalar_lea.vmem [#allocation7], %s303
          %306 = dma.done %s301, 64
        $region48: #{tpu_custom_call.1} parent=43 // pred_fallthru
          _
      $region44: #{tpu_custom_call.1} parent=5 // pred_fallthru
        _
    $region6: #{tpu_custom_call.1} parent=1 // loop_footer
      %s21 = sadd.s32 1, %s17
    $region7: #{tpu_custom_call.1} parent=1 // loop_footer_branch
      %16 = sbr.rel target = $region3
    $region8: #{tpu_custom_call.1} parent=1 // loop_exit
      _
    %307 = vsyncpa [#allocation3], 1
    %s308 = scalar_lea.sflag [#allocation3], 1
    %309 = vsyncpa %s308, 1
    %310 = vsyncpa [#allocation6], 1
    %s311 = scalar_lea.sflag [#allocation6], 1
    %312 = vsyncpa %s311, 1
    %313 = vsyncpa [#allocation4], 1
    %s314 = scalar_lea.sflag [#allocation4], 1
    %315 = vsyncpa %s314, 1

</llo_original>
